<compile_context>
chip_gen: v5e
topology: v5e:2x2
jax: 0.10.0
libtpu: 0.0.40
codegen_flags: <defaults>
</compile_context>

<pallas_src>
import functools

import jax
import jax.numpy as jnp
from jax import lax
from jax.experimental import pallas as pl
from jax.experimental.pallas import tpu as pltpu

_LANE = 128
_SUB = 32          # int8 sublane packing -> align pixel count to 32*128
_MAX_TILE_ROWS = 512


def _skea_loss_kernel(cw_ref, coef_ref, pred_ref, tgt_ref, num_ref, den_ref,
                      *, n_valid, tile_rows, need_mask):
    b = pl.program_id(0)
    r = pl.program_id(1)

    # Lane-dense (tile_rows, 128) planes of logits; upcast in-kernel.
    p0 = pred_ref[0, 0].astype(jnp.float32)
    p1 = pred_ref[0, 1].astype(jnp.float32)
    t = tgt_ref[0].astype(jnp.float32)               # target in {0, 1}

    # Binary (2-class) softmax cross entropy in logit-difference form:
    #   z = p1 - p0 ;  nll = softplus(z) - t*z = relu(z) + log(1+exp(-|z|)) - t*z
    z = p1 - p0
    nll = jnp.maximum(z, 0.0) + jnp.log(1.0 + jnp.exp(-jnp.abs(z))) - t * z

    cw0 = cw_ref[b, 0]                               # per-sample class weight, class 0
    cw1 = cw_ref[b, 1]                               # per-sample class weight, class 1
    coef = coef_ref[0]                               # epoch-dependent skeleton ramp

    # Skeleton-aware weighted CE, with the placeholder weight map (== 1) and
    # placeholder skeleton (== class mask) folded algebraically:
    #   w(x) = (cw0 + coef) for background pixels, (cw1 + coef) for foreground.
    pix_w = (cw0 + coef) + t * (cw1 - cw0)

    if need_mask:
        # Zero out padded pixels (flattened index >= H*W).
        rows = lax.broadcasted_iota(jnp.int32, (tile_rows, _LANE), 0) + r * tile_rows
        lanes = lax.broadcasted_iota(jnp.int32, (tile_rows, _LANE), 1)
        valid = ((rows * _LANE + lanes) < n_valid).astype(jnp.float32)
        pix_w = pix_w * valid

    # Per-grid-cell lane partials (sublane reduction only); lanes are reduced
    # by a tiny XLA sum on the host side of the pallas_call.
    num_ref[0, 0] = jnp.sum(pix_w * nll, axis=0, keepdims=True)
    den_ref[0, 0] = jnp.sum(pix_w, axis=0, keepdims=True)


def skea_topo_loss(pred, target, epoch_num):
    """pred: (B, 2, H, W) logits (any float dtype). target: (B, 1, H, W) in {0,1}."""
    B, C, H, W = pred.shape
    assert C == 2
    N = H * W

    # --- per-sample class-count weights (single-pass counts, /0 guarded) ---
    tar_flat = target.reshape(B, N)
    c1 = jnp.sum(tar_flat.astype(jnp.float32), axis=1)
    c0 = jnp.float32(N) - c1
    counts = jnp.stack([c0, c1], axis=1)                               # (B, 2)
    min_num = jnp.maximum(jnp.min(counts, axis=1, keepdims=True), 1.0)
    cw = counts / min_num
    cw = (jnp.sum(cw, axis=1, keepdims=True) - cw).astype(jnp.float32)  # (B, 2)

    # TODO(synk): SkeletonAwareWeight._get_weight and calc_back_skelen use
    # skimage label/regionprops/Lee-skeletonize/dilation with no Pallas
    # equivalent; the weight maps are taken as 1 and the skeletons as the class
    # masks, and both are folded into the kernel's per-pixel weight.
    # TODO(synk): exact WeightMapBortLoss source is not provided; this is a
    # representative skeleton-aware weighted CE with the same inputs/outputs.
    coef = jnp.minimum(jnp.float32(epoch_num) / 100.0, 1.0).reshape(1)

    # --- lane-dense repacking: (H, W) plane -> (rows, 128) ----------------
    rows_aligned = -(-N // (_SUB * _LANE)) * _SUB          # multiple of 32 rows
    tile_rows = min(_MAX_TILE_ROWS, rows_aligned)
    n_tiles = -(-rows_aligned // tile_rows)
    R = n_tiles * tile_rows
    N_pad = R * _LANE
    need_mask = N_pad != N

    pred_flat = pred.reshape(B, 2, N)                      # bitcast reshape
    tgt_i8 = tar_flat.astype(jnp.int8)
    if need_mask:
        pred_flat = jnp.pad(pred_flat, ((0, 0), (0, 0), (0, N_pad - N)))
        tgt_i8 = jnp.pad(tgt_i8, ((0, 0), (0, N_pad - N)))
    pred_pl = pred_flat.reshape(B, 2, R, _LANE)
    tgt_pl = tgt_i8.reshape(B, R, _LANE)

    kernel = functools.partial(
        _skea_loss_kernel, n_valid=N, tile_rows=tile_rows, need_mask=need_mask)

    num_p, den_p = pl.pallas_call(
        kernel,
        grid=(B, n_tiles),
        in_specs=[
            pl.BlockSpec(memory_space=pltpu.SMEM),                       # class weights (B, 2)
            pl.BlockSpec(memory_space=pltpu.SMEM),                       # ramp coefficient (1,)
            pl.BlockSpec((1, 2, tile_rows, _LANE), lambda b, r: (b, 0, r, 0)),  # logits
            pl.BlockSpec((1, tile_rows, _LANE), lambda b, r: (b, r, 0)),        # target (int8)
        ],
        out_specs=[
            pl.BlockSpec((1, 1, 1, _LANE), lambda b, r: (b, r, 0, 0)),   # partial numerator
            pl.BlockSpec((1, 1, 1, _LANE), lambda b, r: (b, r, 0, 0)),   # partial denominator
        ],
        out_shape=[
            jax.ShapeDtypeStruct((B, n_tiles, 1, _LANE), jnp.float32),
            jax.ShapeDtypeStruct((B, n_tiles, 1, _LANE), jnp.float32),
        ],
        compiler_params=pltpu.CompilerParams(
            dimension_semantics=("parallel", "parallel")),
    )(cw, coef, pred_pl, tgt_pl)

    num = jnp.sum(num_p)
    den = jnp.maximum(jnp.sum(den_p), jnp.float32(1e-12))
    return num / den


if __name__ == "__main__":
    key = jax.random.PRNGKey(0)
    k_pred, k_tgt = jax.random.split(key)
    B, H, W = 2, 16, 16
    pred = jax.random.normal(k_pred, (B, 2, H, W), jnp.float32)
    target = (jax.random.uniform(k_tgt, (B, 1, H, W)) > 0.5).astype(jnp.int32)
    epoch_num = 5

    loss = skea_topo_loss(pred, target, epoch_num)
    jax.block_until_ready(loss)
    assert loss.shape == () and bool(jnp.isfinite(loss))
    print("KERNEL_OK")
</pallas_src>

<mosaic_0001>
module attributes {stable_mosaic.version = 11 : i64} {
  func.func @_skea_loss_kernel(%arg0: i32, %arg1: i32, %arg2: memref<2x2xf32, #tpu.memory_space<smem>>, %arg3: memref<1xf32, #tpu.memory_space<smem>>, %arg4: memref<1x2x32x128xf32, #tpu.memory_space<vmem>>, %arg5: memref<1x32x128xi8, #tpu.memory_space<vmem>>, %arg6: memref<1x1x1x128xf32, #tpu.memory_space<vmem>>, %arg7: memref<1x1x1x128xf32, #tpu.memory_space<vmem>>) attributes {dimension_semantics = [#tpu.dimension_semantics<parallel>, #tpu.dimension_semantics<parallel>], iteration_bounds = array<i64: 2, 1>, scalar_prefetch = 0 : i64, scratch_operands = 0 : i64, tpu.core_type = #tpu.core_type<tc>, window_params = [{transform_indices = @transform_0, window_bounds = array<i64: 2, 2>}, {transform_indices = @transform_1, window_bounds = array<i64: 1>}, {transform_indices = @transform_2, window_bounds = array<i64: 1, 2, 32, 128>}, {transform_indices = @transform_3, window_bounds = array<i64: 1, 32, 128>}, {transform_indices = @transform_4, window_bounds = array<i64: 1, 1, 1, 128>}, {transform_indices = @transform_5, window_bounds = array<i64: 1, 1, 1, 128>}]} {
    %c0 = arith.constant 0 : index
    %c0_0 = arith.constant 0 : index
    %c0_1 = arith.constant 0 : index
    %c0_2 = arith.constant 0 : index
    %0 = vector.load %arg4[%c0, %c0_0, %c0_1, %c0_2] : memref<1x2x32x128xf32, #tpu.memory_space<vmem>>, vector<1x1x32x128xf32>
    %1 = vector.shape_cast %0 : vector<1x1x32x128xf32> to vector<32x128xf32>
    %c0_3 = arith.constant 0 : index
    %c1 = arith.constant 1 : index
    %c0_4 = arith.constant 0 : index
    %c0_5 = arith.constant 0 : index
    %2 = vector.load %arg4[%c0_3, %c1, %c0_4, %c0_5] : memref<1x2x32x128xf32, #tpu.memory_space<vmem>>, vector<1x1x32x128xf32>
    %3 = vector.shape_cast %2 : vector<1x1x32x128xf32> to vector<32x128xf32>
    %c0_6 = arith.constant 0 : index
    %c0_7 = arith.constant 0 : index
    %c0_8 = arith.constant 0 : index
    %4 = vector.load %arg5[%c0_6, %c0_7, %c0_8] : memref<1x32x128xi8, #tpu.memory_space<vmem>>, vector<1x32x128xi8>
    %5 = vector.shape_cast %4 : vector<1x32x128xi8> to vector<32x128xi8>
    %6 = arith.sitofp %5 : vector<32x128xi8> to vector<32x128xf32>
    %7 = arith.subf %3, %1 : vector<32x128xf32>
    %cst = arith.constant 0.000000e+00 : f32
    %8 = vector.broadcast %cst : f32 to vector<32x128xf32>
    %9 = arith.maximumf %7, %8 : vector<32x128xf32>
    %10 = math.absf %7 : vector<32x128xf32>
    %cst_9 = arith.constant 0.000000e+00 : f32
    %11 = vector.broadcast %cst_9 : f32 to vector<32x128xf32>
    %12 = arith.subf %11, %10 : vector<32x128xf32>
    %13 = math.exp %12 : vector<32x128xf32>
    %cst_10 = arith.constant 1.000000e+00 : f32
    %14 = vector.broadcast %cst_10 : f32 to vector<32x128xf32>
    %15 = arith.addf %14, %13 : vector<32x128xf32>
    %16 = math.log %15 : vector<32x128xf32>
    %17 = arith.addf %9, %16 : vector<32x128xf32>
    %18 = arith.mulf %6, %7 : vector<32x128xf32>
    %19 = arith.subf %17, %18 : vector<32x128xf32>
    %20 = arith.index_cast %arg0 : i32 to index
    %c0_11 = arith.constant 0 : index
    %21 = memref.load %arg2[%20, %c0_11] : memref<2x2xf32, #tpu.memory_space<smem>>
    %22 = arith.index_cast %arg0 : i32 to index
    %c1_12 = arith.constant 1 : index
    %23 = memref.load %arg2[%22, %c1_12] : memref<2x2xf32, #tpu.memory_space<smem>>
    %c0_13 = arith.constant 0 : index
    %24 = memref.load %arg3[%c0_13] : memref<1xf32, #tpu.memory_space<smem>>
    %25 = arith.addf %21, %24 : f32
    %26 = arith.subf %23, %21 : f32
    %27 = vector.broadcast %26 : f32 to vector<32x128xf32>
    %28 = arith.mulf %6, %27 : vector<32x128xf32>
    %29 = vector.broadcast %25 : f32 to vector<32x128xf32>
    %30 = arith.addf %29, %28 : vector<32x128xf32>
    %31 = tpu.iota {dimensions = array<i32: 0>} : vector<32x128xi32>
    %c32_i32 = arith.constant 32 : i32
    %32 = arith.muli %arg1, %c32_i32 : i32
    %33 = vector.broadcast %32 : i32 to vector<32x128xi32>
    %34 = arith.addi %31, %33 : vector<32x128xi32>
    %35 = tpu.iota {dimensions = array<i32: 1>} : vector<32x128xi32>
    %c128_i32 = arith.constant 128 : i32
    %36 = vector.broadcast %c128_i32 : i32 to vector<32x128xi32>
    %37 = arith.muli %34, %36 : vector<32x128xi32>
    %38 = arith.addi %37, %35 : vector<32x128xi32>
    %c256_i32 = arith.constant 256 : i32
    %39 = vector.broadcast %c256_i32 : i32 to vector<32x128xi32>
    %40 = arith.cmpi slt, %38, %39 : vector<32x128xi32>
    %41 = arith.extui %40 : vector<32x128xi1> to vector<32x128xi32>
    %42 = arith.sitofp %41 : vector<32x128xi32> to vector<32x128xf32>
    %43 = arith.mulf %30, %42 : vector<32x128xf32>
    %44 = arith.mulf %43, %19 : vector<32x128xf32>
    %cst_14 = arith.constant dense<0.000000e+00> : vector<128xf32>
    %45 = vector.multi_reduction <add>, %44, %cst_14 [0] : vector<32x128xf32> to vector<128xf32>
    %46 = vector.shape_cast %45 : vector<128xf32> to vector<1x128xf32>
    %c0_15 = arith.constant 0 : index
    %c0_16 = arith.constant 0 : index
    %c0_17 = arith.constant 0 : index
    %c0_18 = arith.constant 0 : index
    %47 = vector.load %arg6[%c0_15, %c0_16, %c0_17, %c0_18] : memref<1x1x1x128xf32, #tpu.memory_space<vmem>>, vector<1x1x1x128xf32>
    %48 = vector.shape_cast %47 : vector<1x1x1x128xf32> to vector<1x128xf32>
    %49 = vector.shape_cast %46 : vector<1x128xf32> to vector<1x1x1x128xf32>
    tpu.vector_store %arg6[%c0_15, %c0_16, %c0_17, %c0_18], %49 {strides = array<i32>} : memref<1x1x1x128xf32, #tpu.memory_space<vmem>>, vector<1x1x1x128xf32>,
    %cst_19 = arith.constant dense<0.000000e+00> : vector<128xf32>
    %50 = vector.multi_reduction <add>, %43, %cst_19 [0] : vector<32x128xf32> to vector<128xf32>
    %51 = vector.shape_cast %50 : vector<128xf32> to vector<1x128xf32>
    %c0_20 = arith.constant 0 : index
    %c0_21 = arith.constant 0 : index
    %c0_22 = arith.constant 0 : index
    %c0_23 = arith.constant 0 : index
    %52 = vector.load %arg7[%c0_20, %c0_21, %c0_22, %c0_23] : memref<1x1x1x128xf32, #tpu.memory_space<vmem>>, vector<1x1x1x128xf32>
    %53 = vector.shape_cast %52 : vector<1x1x1x128xf32> to vector<1x128xf32>
    %54 = vector.shape_cast %51 : vector<1x128xf32> to vector<1x1x1x128xf32>
    tpu.vector_store %arg7[%c0_20, %c0_21, %c0_22, %c0_23], %54 {strides = array<i32>} : memref<1x1x1x128xf32, #tpu.memory_space<vmem>>, vector<1x1x1x128xf32>,
    return
  }
  func.func @transform_0(%arg0: i32, %arg1: i32) -> (i32, i32) {
    %c0_i32 = arith.constant 0 : i32
    %c0_i32_0 = arith.constant 0 : i32
    %c0_i32_1 = arith.constant 0 : i32
    return %c0_i32, %c0_i32_0 : i32, i32
  }
  func.func @transform_1(%arg0: i32, %arg1: i32) -> i32 {
    %c0_i32 = arith.constant 0 : i32
    %c0_i32_0 = arith.constant 0 : i32
    return %c0_i32 : i32
  }
  func.func @transform_2(%arg0: i32, %arg1: i32) -> (i32, i32, i32, i32) {
    %c0_i32 = arith.constant 0 : i32
    %c0_i32_0 = arith.constant 0 : i32
    %c0_i32_1 = arith.constant 0 : i32
    return %arg0, %c0_i32, %arg1, %c0_i32_0 : i32, i32, i32, i32
  }
  func.func @transform_3(%arg0: i32, %arg1: i32) -> (i32, i32, i32) {
    %c0_i32 = arith.constant 0 : i32
    %c0_i32_0 = arith.constant 0 : i32
    return %arg0, %arg1, %c0_i32 : i32, i32, i32
  }
  func.func @transform_4(%arg0: i32, %arg1: i32) -> (i32, i32, i32, i32) {
    %c0_i32 = arith.constant 0 : i32
    %c0_i32_0 = arith.constant 0 : i32
    %c0_i32_1 = arith.constant 0 : i32
    return %arg0, %arg1, %c0_i32, %c0_i32_0 : i32, i32, i32, i32
  }
  func.func @transform_5(%arg0: i32, %arg1: i32) -> (i32, i32, i32, i32) {
    %c0_i32 = arith.constant 0 : i32
    %c0_i32_0 = arith.constant 0 : i32
    %c0_i32_1 = arith.constant 0 : i32
    return %arg0, %arg1, %c0_i32, %c0_i32_0 : i32, i32, i32, i32
  }
}

</mosaic_0001>

<llo_original>
// kernel: tpu_custom_call.1
$region0: #{tpu_custom_call.1}
  #allocation0 [shape = 'u32[]', space=smem, size = 0x4, offset = 0x4, fixed_abs, tag = 'smem constant byte address 0x4 - core index']
  #allocation1 [shape = 'u32[72,128]{1,0:T(1,128)}', space=vmem, size = 0x9000, scoped, tag = 'internal scratch']
  #allocation2 [shape = 'f32[1]{0:T(128)S(6)}', space=smem, size = 0x200, scoped, tag = 'scoped memory for tpu_custom_call.1']
  %s0 = inlined_call_operand.vmem [shape: f32[2,2], index: 0, kind: input, shape index: {}]
  %s1 = inlined_call_operand.<no memory space> [shape: f32[1], index: 1, kind: input, shape index: {}]
  %s2 = inlined_call_operand.hbm [shape: f32[2,2,32,128], index: 2, kind: input, shape index: {}]
  %s3 = inlined_call_operand.hbm [shape: s8[2,32,128], index: 3, kind: input, shape index: {}]
  %s4 = inlined_call_operand.hbm [shape: f32[2,1,1,128], index: 4, kind: output, shape index: {0}]
  %s5 = inlined_call_operand.hbm [shape: f32[2,1,1,128], index: 5, kind: output, shape index: {1}]
  %6 = xla_tuple %s4, %s5
  %s7 = sld [smem:[#allocation0]]
  $region69: #{tpu_custom_call.1} parent=0
    _
  %s9 = ssub.s32 1, %s7
  %s10 = scalar_select 0, %s9, %s7
  %11 = sst [smem:[#allocation2]] %s1
  $region1: #{tpu_custom_call.1} parent=0
    #allocation3 [shape = 'u8[1024]{0}', space=smem, size = 0x400, scoped, tag = 'input window, operand 0, single buffered']
    #allocation4 [shape = 's32[2]{0}', space=sflag, size = 0x8, scoped, tag = 'scoped memory for tpu_custom_call.1']
    #allocation5 [shape = 's32[2]{0}', space=sflag, size = 0x8, scoped, tag = 'scoped memory for tpu_custom_call.1']
    #allocation6 [shape = 's32[2]{0}', space=sflag, size = 0x8, scoped, tag = 'scoped memory for tpu_custom_call.1']
    #allocation7 [shape = 'u8[65536]{0}', space=vmem, size = 0x10000, scoped, tag = 'input window, operand 2']
    #allocation8 [shape = 'u8[8192]{0}', space=vmem, size = 0x2000, scoped, tag = 'input window, operand 3']
    #allocation9 [shape = 's32[2]{0}', space=sflag, size = 0x8, scoped, tag = 'scoped memory for tpu_custom_call.1']
    #allocation10 [shape = 'u8[1024]{0}', space=vmem, size = 0x400, scoped, tag = 'output window, operand 0']
    #allocation11 [shape = 'u8[1024]{0}', space=vmem, size = 0x400, scoped, tag = 'output window, operand 1']
    #allocation12 [shape = 's32[2]{0}', space=sflag, size = 0x8, scoped, tag = 'scoped memory for tpu_custom_call.1']
    %12 = vsyncpa [#allocation6], 0
    %13 = vsyncpa [#allocation4], 0
    %s14 = scalar_lea.sflag [#allocation4], 1
    %15 = vsyncpa %s14, 0
    %16 = vsyncpa [#allocation9], 0
    %s17 = scalar_lea.sflag [#allocation9], 1
    %18 = vsyncpa %s17, 0
    %19 = vsyncpa [#allocation5], 0
    %s20 = scalar_lea.sflag [#allocation5], 1
    %21 = vsyncpa %s20, 0
    %22 = vsyncpa [#allocation12], 0
    %s23 = scalar_lea.sflag [#allocation12], 1
    %24 = vsyncpa %s23, 0
    loop: start=0, step=1, limit=4
    $region2: #{tpu_custom_call.1} parent=1 // loop_pre_header
      _
    $region3: #{tpu_custom_call.1} parent=1 // loop_header
      %s26 = sphi 0, %s30
      %p27 = scmp.ge.s32.totalorder %s26, 4
      %s33 = sphi 0, %s45
      %s34 = sphi 0, %s41
      %s35 = sphi 0, %s33
      %s36 = sphi 0, %s34
      %s37 = sphi 0, %s35
      %s38 = sphi 0, %s36
      %s46 = sphi 0, %s46
      %s48 = sphi 0, %s46
      %s49 = sphi 0, %s48
      %s63 = sphi 0, %s49
      %s67 = sphi 0, %s67
      %s69 = sphi 0, %s67
      %s70 = sphi 0, %s69
      %s84 = sphi 0, %s70
      %s92 = sphi 0, %s94
      %s95 = sphi 0, %s92
      %s96 = sphi 0, %s95
      %s112 = sphi 0, %s96
      %s120 = sphi 0, %s122
      %s123 = sphi 0, %s120
      %s124 = sphi 0, %s123
      %s140 = sphi 0, %s124
      %s148 = sphi 0, %s150
      %s151 = sphi 0, %s148
      %s152 = sphi 0, %s151
      %s168 = sphi 0, %s152
      %s176 = sphi 0, %s178
      %s179 = sphi 0, %s176
      %s180 = sphi 0, %s179
      %s196 = sphi 0, %s180
    $region4: #{tpu_custom_call.1} parent=1 // loop_header_branch
      %29 = sbr.rel (%p27) target = $region8
    $region5: #{tpu_custom_call.1} parent=1 // loop_body
      %s31 = ssub.s32 %s26, 1
      %s32 = ssub.s32 %s26, 2
      %s39 = sadd.s32 1, %s34
      %p40 = scmp.ge.s32.totalorder %s39, 1
      %s41 = scalar_select %p40, 0, %s39
      %s42 = sadd.s32 1, %s33
      %s43 = scalar_select %p40, %s42, %s33
      %p44 = scmp.ge.s32.totalorder %s43, 2
      %s45 = scalar_select %p44, 0, %s43
      %s47 = sadd.s32 %s46, 1
      %p50 = scmp.eq.s32.totalorder %s26, 1
      %p51 = scmp.ne.s32.totalorder %s46, %s48
      %p52 = scmp.eq.s32.totalorder %s26, 0
      %p53 = por %p51, %p52
      %p54 = scmp.ne.s32.totalorder %s46, %s48
      %p55 = scmp.eq.s32.totalorder %s31, 1
      %p56 = por %p54, %p55
      %p57 = scmp.ne.s32.totalorder %s48, %s49
      %p58 = scmp.eq.s32.totalorder %s31, 0
      %p59 = por %p57, %p58
      %p60 = scmp.ne.s32.totalorder %s48, %s49
      %p61 = scmp.eq.s32.totalorder %s32, 1
      %p62 = por %p60, %p61
      %p64 = scmp.ne.s32.totalorder %s49, %s63
      %p65 = scmp.eq.s32.totalorder %s32, 0
      %p66 = por %p64, %p65
      %s68 = sadd.s32 %s67, 1
      %p71 = scmp.eq.s32.totalorder %s26, 1
      %p72 = scmp.ne.s32.totalorder %s67, %s69
      %p73 = scmp.eq.s32.totalorder %s26, 0
      %p74 = por %p72, %p73
      %p75 = scmp.ne.s32.totalorder %s67, %s69
      %p76 = scmp.eq.s32.totalorder %s31, 1
      %p77 = por %p75, %p76
      %p78 = scmp.ne.s32.totalorder %s69, %s70
      %p79 = scmp.eq.s32.totalorder %s31, 0
      %p80 = por %p78, %p79
      %p81 = scmp.ne.s32.totalorder %s69, %s70
      %p82 = scmp.eq.s32.totalorder %s32, 1
      %p83 = por %p81, %p82
      %p85 = scmp.ne.s32.totalorder %s70, %s84
      %p86 = scmp.eq.s32.totalorder %s32, 0
      %p87 = por %p85, %p86
      %s88 = ssub.s32 %s33, %s45
      %s89 = ssub.s32 %s34, %s41
      %s90 = sor.u32 %s88, %s89
      %p91 = scmp.eq.s32.totalorder %s90, 0
      %s93 = sadd.s32 %s92, 1
      %s94 = scalar_select %p91, %s92, %s93
      %p97 = pneg %p91
      %p98 = scmp.eq.s32.totalorder %s26, 1
      %p99 = por %p97, %p98
      %p100 = scmp.ne.s32.totalorder %s92, %s95
      %p101 = scmp.eq.s32.totalorder %s26, 0
      %p102 = por %p100, %p101
      %p103 = scmp.ne.s32.totalorder %s92, %s95
      %p104 = scmp.eq.s32.totalorder %s31, 1
      %p105 = por %p103, %p104
      %p106 = scmp.ne.s32.totalorder %s95, %s96
      %p107 = scmp.eq.s32.totalorder %s31, 0
      %p108 = por %p106, %p107
      %p109 = scmp.ne.s32.totalorder %s95, %s96
      %p110 = scmp.eq.s32.totalorder %s32, 1
      %p111 = por %p109, %p110
      %p113 = scmp.ne.s32.totalorder %s96, %s112
      %p114 = scmp.eq.s32.totalorder %s32, 0
      %p115 = por %p113, %p114
      %s116 = ssub.s32 %s33, %s45
      %s117 = ssub.s32 %s34, %s41
      %s118 = sor.u32 %s116, %s117
      %p119 = scmp.eq.s32.totalorder %s118, 0
      %s121 = sadd.s32 %s120, 1
      %s122 = scalar_select %p119, %s120, %s121
      %p125 = pneg %p119
      %p126 = scmp.eq.s32.totalorder %s26, 1
      %p127 = por %p125, %p126
      %p128 = scmp.ne.s32.totalorder %s120, %s123
      %p129 = scmp.eq.s32.totalorder %s26, 0
      %p130 = por %p128, %p129
      %p131 = scmp.ne.s32.totalorder %s120, %s123
      %p132 = scmp.eq.s32.totalorder %s31, 1
      %p133 = por %p131, %p132
      %p134 = scmp.ne.s32.totalorder %s123, %s124
      %p135 = scmp.eq.s32.totalorder %s31, 0
      %p136 = por %p134, %p135
      %p137 = scmp.ne.s32.totalorder %s123, %s124
      %p138 = scmp.eq.s32.totalorder %s32, 1
      %p139 = por %p137, %p138
      %p141 = scmp.ne.s32.totalorder %s124, %s140
      %p142 = scmp.eq.s32.totalorder %s32, 0
      %p143 = por %p141, %p142
      %s144 = ssub.s32 %s33, %s45
      %s145 = ssub.s32 %s34, %s41
      %s146 = sor.u32 %s144, %s145
      %p147 = scmp.eq.s32.totalorder %s146, 0
      %s149 = sadd.s32 %s148, 1
      %s150 = scalar_select %p147, %s148, %s149
      %p153 = pneg %p147
      %p154 = scmp.eq.s32.totalorder %s26, 1
      %p155 = por %p153, %p154
      %p156 = scmp.ne.s32.totalorder %s148, %s151
      %p157 = scmp.eq.s32.totalorder %s26, 0
      %p158 = por %p156, %p157
      %p159 = scmp.ne.s32.totalorder %s148, %s151
      %p160 = scmp.eq.s32.totalorder %s31, 1
      %p161 = por %p159, %p160
      %p162 = scmp.ne.s32.totalorder %s151, %s152
      %p163 = scmp.eq.s32.totalorder %s31, 0
      %p164 = por %p162, %p163
      %p165 = scmp.ne.s32.totalorder %s151, %s152
      %p166 = scmp.eq.s32.totalorder %s32, 1
      %p167 = por %p165, %p166
      %p169 = scmp.ne.s32.totalorder %s152, %s168
      %p170 = scmp.eq.s32.totalorder %s32, 0
      %p171 = por %p169, %p170
      %s172 = ssub.s32 %s33, %s45
      %s173 = ssub.s32 %s34, %s41
      %s174 = sor.u32 %s172, %s173
      %p175 = scmp.eq.s32.totalorder %s174, 0
      %s177 = sadd.s32 %s176, 1
      %s178 = scalar_select %p175, %s176, %s177
      %p181 = pneg %p175
      %p182 = scmp.eq.s32.totalorder %s26, 1
      %p183 = por %p181, %p182
      %p184 = scmp.ne.s32.totalorder %s176, %s179
      %p185 = scmp.eq.s32.totalorder %s26, 0
      %p186 = por %p184, %p185
      %p187 = scmp.ne.s32.totalorder %s176, %s179
      %p188 = scmp.eq.s32.totalorder %s31, 1
      %p189 = por %p187, %p188
      %p190 = scmp.ne.s32.totalorder %s179, %s180
      %p191 = scmp.eq.s32.totalorder %s31, 0
      %p192 = por %p190, %p191
      %p193 = scmp.ne.s32.totalorder %s179, %s180
      %p194 = scmp.eq.s32.totalorder %s32, 1
      %p195 = por %p193, %p194
      %p197 = scmp.ne.s32.totalorder %s180, %s196
      %p198 = scmp.eq.s32.totalorder %s32, 0
      %p199 = por %p197, %p198
      %p200 = scmp.le.s32.totalorder 1, %s26
      %p201 = scmp.lt.s32.totalorder %s26, 3
      %p202 = pnand %p200, %p201
      %p203 = pneg %p202
      // Predicated region
      $region9: #{tpu_custom_call.1} parent=5 // pred_check
        _
      $region10: #{tpu_custom_call.1} parent=5 // pred_check_branch
        %205 = sbr.rel (%p202) target = $region12
      $region11: #{tpu_custom_call.1} parent=5 // pred_region
        %s206 = ssub.s32 %s26, 1
        // Predicated region
        $region13: #{tpu_custom_call.1} parent=11 // pred_check
          %p207 = pneg %p59
        $region14: #{tpu_custom_call.1} parent=11 // pred_check_branch
          %209 = sbr.rel (%p207) target = $region16
        $region15: #{tpu_custom_call.1} parent=11 // pred_region
          %211 = vsyncadd [#allocation6], 0
          %s213 = sshll.u32 %s0, 4
          %s214 = int_to_ptr.vmem [resolvable:$true] %s213
          %216 = dma.vmem_to_smem %s214, 32, [#allocation3], [#allocation6]
        $region16: #{tpu_custom_call.1} parent=11 // pred_fallthru
          _
        // Predicated region
        $region17: #{tpu_custom_call.1} parent=11 // pred_check
          %p217 = pneg %p80
        $region18: #{tpu_custom_call.1} parent=11 // pred_check_branch
          %219 = sbr.rel (%p217) target = $region20
        $region19: #{tpu_custom_call.1} parent=11 // pred_region
          _
        $region20: #{tpu_custom_call.1} parent=11 // pred_fallthru
          _
      $region12: #{tpu_custom_call.1} parent=5 // pred_fallthru
        _
      %p220 = scmp.lt.s32.totalorder %s26, 2
      // Predicated region
      $region21: #{tpu_custom_call.1} parent=5 // pred_check
        %p221 = pneg %p220
      $region22: #{tpu_custom_call.1} parent=5 // pred_check_branch
        %223 = sbr.rel (%p221) target = $region24
      $region23: #{tpu_custom_call.1} parent=5 // pred_region
        // Predicated region
        $region25: #{tpu_custom_call.1} parent=23 // pred_check
          %p224 = pneg %p102
        $region26: #{tpu_custom_call.1} parent=23 // pred_check_branch
          %226 = sbr.rel (%p224) target = $region28
        $region27: #{tpu_custom_call.1} parent=23 // pred_region
          %s227 = sand.u32 %s92, 1
          %s228 = scalar_lea.sflag [#allocation4], %s227
          %s229 = sand.u32 %s92, 1
          %s230 = smul.addr %s229, 64
          %s231 = scalar_lea.vmem [#allocation7], %s230
          %s232 = smul.u32 4, %s34
          %234 = vsyncadd %s228, 0
          %s235 = smul.addr %s33, 8
          %s236 = sadd.s32 %s232, %s235
          %s237 = smul.addr %s236, 8
          %s238 = scalar_lea.hbm %s2, %s237
          %s239 = sshll.u32 %s238, 4
          %s240 = int_to_ptr.hbm [resolvable:$true] %s239
          %s241 = sshll.u32 %s231, 4
          %s242 = int_to_ptr.vmem [resolvable:$true] %s241
          %247 = dma.hbm_to_vmem [thread:$0]  %s240, 1024, %s242, %s228, 128, 128, 8
        $region28: #{tpu_custom_call.1} parent=23 // pred_fallthru
          _
        // Predicated region
        $region29: #{tpu_custom_call.1} parent=23 // pred_check
          %p248 = pneg %p130
        $region30: #{tpu_custom_call.1} parent=23 // pred_check_branch
          %250 = sbr.rel (%p248) target = $region32
        $region31: #{tpu_custom_call.1} parent=23 // pred_region
          %s251 = sand.u32 %s120, 1
          %s252 = scalar_lea.sflag [#allocation9], %s251
          %s253 = sand.u32 %s120, 1
          %s254 = smul.addr %s253, 8
          %s255 = scalar_lea.vmem [#allocation8], %s254
          %257 = vsyncadd %s252, 0
          %s258 = sadd.s32 %s34, %s33
          %s259 = smul.addr %s258, 8
          %s260 = scalar_lea.hbm %s3, %s259
          %s262 = sshll.u32 %s260, 4
          %s263 = int_to_ptr.hbm [resolvable:$true] %s262
          %s264 = sshll.u32 %s255, 4
          %s265 = int_to_ptr.vmem [resolvable:$true] %s264
          %267 = dma.hbm_to_vmem [thread:$0]  %s263, 128, %s265, %s252
        $region32: #{tpu_custom_call.1} parent=23 // pred_fallthru
          _
      $region24: #{tpu_custom_call.1} parent=5 // pred_fallthru
        _
      %p268 = scmp.le.s32.totalorder 1, %s26
      %p269 = scmp.lt.s32.totalorder %s26, 3
      %p270 = pnand %p268, %p269
      %p271 = pneg %p270
      // Predicated region
      $region33: #{tpu_custom_call.1} parent=5 // pred_check
        _
      $region34: #{tpu_custom_call.1} parent=5 // pred_check_branch
        %273 = sbr.rel (%p270) target = $region36
      $region35: #{tpu_custom_call.1} parent=5 // pred_region
        %s274 = ssub.s32 %s26, 1
        // Predicated region
        $region37: #{tpu_custom_call.1} parent=35 // pred_check
          %p275 = pneg %p59
        $region38: #{tpu_custom_call.1} parent=35 // pred_check_branch
          %277 = sbr.rel (%p275) target = $region40
        $region39: #{tpu_custom_call.1} parent=35 // pred_region
          %279 = dma.done [#allocation6], 32
        $region40: #{tpu_custom_call.1} parent=35 // pred_fallthru
          _
        %s280 = sand.u32 %s95, 1
        %s281 = scalar_lea.sflag [#allocation4], %s280
        %s282 = sand.u32 %s95, 1
        %s283 = smul.addr %s282, 64
        %s284 = scalar_lea.vmem [#allocation7], %s283
        // Predicated region
        $region41: #{tpu_custom_call.1} parent=35 // pred_check
          %p285 = pneg %p108
        $region42: #{tpu_custom_call.1} parent=35 // pred_check_branch
          %287 = sbr.rel (%p285) target = $region44
        $region43: #{tpu_custom_call.1} parent=35 // pred_region
          %289 = dma.done %s281, 1024
        $region44: #{tpu_custom_call.1} parent=35 // pred_fallthru
          _
        %s290 = sand.u32 %s123, 1
        %s291 = scalar_lea.sflag [#allocation9], %s290
        %s292 = sand.u32 %s123, 1
        %s293 = smul.addr %s292, 8
        %s294 = scalar_lea.vmem [#allocation8], %s293
        // Predicated region
        $region45: #{tpu_custom_call.1} parent=35 // pred_check
          %p295 = pneg %p136
        $region46: #{tpu_custom_call.1} parent=35 // pred_check_branch
          %297 = sbr.rel (%p295) target = $region48
        $region47: #{tpu_custom_call.1} parent=35 // pred_region
          %299 = dma.done %s291, 128
        $region48: #{tpu_custom_call.1} parent=35 // pred_fallthru
          _
        %300 = sfence
        %p301 = pneg %p59
        %p302 = pneg %p56
        %p303 = pneg %p80
        %p304 = pneg %p77
        %s305 = sand.u32 %s95, 1
        %s306 = scalar_lea.sflag [#allocation4], %s305
        %s307 = sand.u32 %s95, 1
        %s308 = smul.addr %s307, 64
        %s309 = scalar_lea.vmem [#allocation7], %s308
        %p310 = pneg %p108
        %p311 = pneg %p105
        %s312 = sand.u32 %s123, 1
        %s313 = scalar_lea.sflag [#allocation9], %s312
        %s314 = sand.u32 %s123, 1
        %s315 = smul.addr %s314, 8
        %s316 = scalar_lea.vmem [#allocation8], %s315
        %p317 = pneg %p136
        %p318 = pneg %p133
        %p319 = pneg %p164
        %p320 = pneg %p161
        %s321 = sand.u32 %s151, 1
        %s322 = scalar_lea.sflag [#allocation5], %s321
        %s323 = sand.u32 %s151, 1
        %s324 = scalar_lea.vmem [#allocation10], %s323
        %p325 = pneg %p192
        %p326 = pneg %p189
        %s327 = sand.u32 %s179, 1
        %s328 = scalar_lea.sflag [#allocation12], %s327
        %s329 = sand.u32 %s179, 1
        %s330 = scalar_lea.vmem [#allocation11], %s329
        %s331 = smul.u32 4, %s36
        %v332 = vld [vmem:[%s284] sm:$0xff]
        %v333 = vld [vmem:[%s284 + $0x8] sm:$0xff]
        %v334 = vld [vmem:[%s284 + $0x10] sm:$0xff]
        %v335 = vld [vmem:[%s284 + $0x18] sm:$0xff]
        %s336 = scalar_lea.vmem %s284, 32 [#allocation7]
        %v337 = vld [vmem:[%s336] sm:$0xff]
        %v338 = vld [vmem:[%s336 + $0x8] sm:$0xff]
        %v339 = vld [vmem:[%s336 + $0x10] sm:$0xff]
        %v340 = vld [vmem:[%s336 + $0x18] sm:$0xff]
        %v341 = vld [vmem:[%s294] sm:$0xff]
        %v342 = vunpack.c.0.s8 %v341
        %v343 = vunpack.c.1.s8 %v341
        %v344 = vunpack.c.2.s8 %v341
        %v345 = vunpack.c.3.s8 %v341
        %v346 = vcvt.s32.f32 %v342
        %v347 = vcvt.s32.f32 %v343
        %v348 = vcvt.s32.f32 %v344
        %v349 = vcvt.s32.f32 %v345
        %v350 = vsub.f32 %v337, %v332
        %v351 = vsub.f32 %v338, %v333
        %v352 = vsub.f32 %v339, %v334
        %v353 = vsub.f32 %v340, %v335
        %v354 = vmax.f32 %v350, 0.0
        %v355 = vmax.f32 %v351, 0.0
        %v356 = vmax.f32 %v352, 0.0
        %v357 = vmax.f32 %v353, 0.0
        %v358 = vand.u32 2147483647, %v350
        %v359 = vand.u32 2147483647, %v351
        %v360 = vand.u32 2147483647, %v352
        %v361 = vand.u32 2147483647, %v353
        %v362 = vsub.f32 0.0, %v358
        %v363 = vsub.f32 0.0, %v359
        %v364 = vsub.f32 0.0, %v360
        %v365 = vsub.f32 0.0, %v361
        %v366 = vmul.f32 %v362, 1.442695
        %v367 = vpow.pop %v366
        %v368 = vmul.f32 %v363, 1.442695
        %v369 = vpow.pop %v368
        %v370 = vmul.f32 %v364, 1.442695
        %v371 = vpow.pop %v370
        %v372 = vmul.f32 %v365, 1.442695
        %v373 = vpow.pop %v372
        %v374 = vadd.f32 %v367, 1.0
        %v375 = vadd.f32 %v369, 1.0
        %v376 = vadd.f32 %v371, 1.0
        %v377 = vadd.f32 %v373, 1.0
        %v378 = vlog2.pop %v374
        %v379 = vmul.f32 %v378, 0.6931472
        %v380 = vlog2.pop %v375
        %v381 = vmul.f32 %v380, 0.6931472
        %v382 = vlog2.pop %v376
        %v383 = vmul.f32 %v382, 0.6931472
        %v384 = vlog2.pop %v377
        %v385 = vmul.f32 %v384, 0.6931472
        %v386 = vadd.f32 %v354, %v379
        %v387 = vadd.f32 %v355, %v381
        %v388 = vadd.f32 %v356, %v383
        %v389 = vadd.f32 %v357, %v385
        %v390 = vmul.f32 %v346, %v350
        %v391 = vmul.f32 %v347, %v351
        %v392 = vmul.f32 %v348, %v352
        %v393 = vmul.f32 %v349, %v353
        %v394 = vsub.f32 %v386, %v390
        %v395 = vsub.f32 %v387, %v391
        %v396 = vsub.f32 %v388, %v392
        %v397 = vsub.f32 %v389, %v393
        %s398 = smul.u32 %s35, 128
        %s399 = sld [smem:[#allocation3 + %s398]]
        %s400 = sadd.s32 %s398, 1
        %s401 = sld [smem:[#allocation3 + %s400]]
        %s402 = sld [smem:[#allocation2]]
        %s403 = sadd.f32 %s399, %s402
        %s404 = ssub.f32 %s401, %s399
        %v405 = vstv %s404
        %v406 = vmul.f32 %v346, %v405
        %v407 = vmul.f32 %v347, %v405
        %v408 = vmul.f32 %v348, %v405
        %v409 = vmul.f32 %v349, %v405
        %v410 = vstv %s403
        %v411 = vadd.f32 %v410, %v406
        %v412 = vadd.f32 %v410, %v407
        %v413 = vadd.f32 %v410, %v408
        %v414 = vadd.f32 %v410, %v409
        %v415 = vlaneseq
        %v416 = vshrl.u32 %v415, 7
        %v417 = vadd.s32 %v416, 8
        %v418 = vadd.s32 %v416, 16
        %v419 = vadd.s32 %v416, 24
        %s420 = smul.u32 %s36, 32
        %v421 = vstv %s420
        %v422 = vadd.s32 %v416, %v421
        %v423 = vadd.s32 %v417, %v421
        %v424 = vadd.s32 %v418, %v421
        %v425 = vadd.s32 %v419, %v421
        %v426 = vlaneseq
        %v427 = vand.u32 %v426, 127
        %v428 = vmul.u32 %v422, 128
        %v429 = vmul.u32 %v423, 128
        %v430 = vmul.u32 %v424, 128
        %v431 = vmul.u32 %v425, 128
        %v432 = vadd.s32 %v428, %v427
        %v433 = vadd.s32 %v429, %v427
        %v434 = vadd.s32 %v430, %v427
        %v435 = vadd.s32 %v431, %v427
        %vm436 = vcmp.lt.s32.totalorder %v432, 256
        %vm437 = vcmp.lt.s32.totalorder %v433, 256
        %vm438 = vcmp.lt.s32.totalorder %v434, 256
        %vm439 = vcmp.lt.s32.totalorder %v435, 256
        %v440 = vsel %vm436, 1, 0
        %v441 = vsel %vm437, 1, 0
        %v442 = vsel %vm438, 1, 0
        %v443 = vsel %vm439, 1, 0
        %v444 = vcvt.s32.f32 %v440
        %v445 = vcvt.s32.f32 %v441
        %v446 = vcvt.s32.f32 %v442
        %v447 = vcvt.s32.f32 %v443
        %v448 = vmul.f32 %v411, %v444
        %v449 = vmul.f32 %v412, %v445
        %v450 = vmul.f32 %v413, %v446
        %v451 = vmul.f32 %v414, %v447
        %v452 = vmul.f32 %v448, %v394
        %v453 = vmul.f32 %v449, %v395
        %v454 = vmul.f32 %v450, %v396
        %v455 = vmul.f32 %v451, %v397
        %v456 = vadd.f32 %v452, %v453
        %v457 = vadd.f32 %v456, %v454
        %v458 = vadd.f32 %v457, %v455
        %v459 = vrot.slane %v458, 4
        %v460 = vadd.f32 %v458, %v459
        %v461 = vrot.slane %v460, 2
        %v462 = vadd.f32 %v460, %v461
        %v463 = vrot.slane %v462, 1
        %v464 = vadd.f32 %v462, %v463
        %465 = vst [vmem:[%s324] sm:$0x1] %v464
        %v466 = vadd.f32 %v448, %v449
        %v467 = vadd.f32 %v466, %v450
        %v468 = vadd.f32 %v467, %v451
        %v469 = vrot.slane %v468, 4
        %v470 = vadd.f32 %v468, %v469
        %v471 = vrot.slane %v470, 2
        %v472 = vadd.f32 %v470, %v471
        %v473 = vrot.slane %v472, 1
        %v474 = vadd.f32 %v472, %v473
        %475 = vst [vmem:[%s330] sm:$0x1] %v474
        %s476 = sand.u32 %s151, 1
        %s477 = scalar_lea.sflag [#allocation5], %s476
        %s478 = sand.u32 %s151, 1
        %s479 = scalar_lea.vmem [#allocation10], %s478
        %s480 = sand.u32 %s179, 1
        %s481 = scalar_lea.sflag [#allocation12], %s480
        %s482 = sand.u32 %s179, 1
        %s483 = scalar_lea.vmem [#allocation11], %s482
        // Predicated region
        $region49: #{tpu_custom_call.1} parent=35 // pred_check
          %p484 = pneg %p161
        $region50: #{tpu_custom_call.1} parent=35 // pred_check_branch
          %486 = sbr.rel (%p484) target = $region52
        $region51: #{tpu_custom_call.1} parent=35 // pred_region
          %488 = vsyncadd %s477, 0
          %s489 = sadd.s32 %s36, %s35
          %s490 = scalar_lea.hbm %s4, %s489
          %s492 = sshll.u32 %s479, 4
          %s493 = int_to_ptr.vmem [resolvable:$true] %s492
          %s494 = sshll.u32 %s490, 4
          %s495 = int_to_ptr.hbm [resolvable:$true] %s494
          %497 = dma.vmem_to_hbm [thread:$0]  %s493, 16, %s495, %s477
        $region52: #{tpu_custom_call.1} parent=35 // pred_fallthru
          _
        // Predicated region
        $region53: #{tpu_custom_call.1} parent=35 // pred_check
          %p498 = pneg %p189
        $region54: #{tpu_custom_call.1} parent=35 // pred_check_branch
          %500 = sbr.rel (%p498) target = $region56
        $region55: #{tpu_custom_call.1} parent=35 // pred_region
          %502 = vsyncadd %s481, 0
          %s503 = sadd.s32 %s36, %s35
          %s504 = scalar_lea.hbm %s5, %s503
          %s506 = sshll.u32 %s483, 4
          %s507 = int_to_ptr.vmem [resolvable:$true] %s506
          %s508 = sshll.u32 %s504, 4
          %s509 = int_to_ptr.hbm [resolvable:$true] %s508
          %511 = dma.vmem_to_hbm [thread:$0]  %s507, 16, %s509, %s481
        $region56: #{tpu_custom_call.1} parent=35 // pred_fallthru
          _
      $region36: #{tpu_custom_call.1} parent=5 // pred_fallthru
        _
      %p512 = scmp.le.s32.totalorder 2, %s26
      // Predicated region
      $region57: #{tpu_custom_call.1} parent=5 // pred_check
        %p513 = pneg %p512
      $region58: #{tpu_custom_call.1} parent=5 // pred_check_branch
        %515 = sbr.rel (%p513) target = $region60
      $region59: #{tpu_custom_call.1} parent=5 // pred_region
        %s516 = ssub.s32 %s26, 2
        // Predicated region
        $region61: #{tpu_custom_call.1} parent=59 // pred_check
          %p517 = pneg %p167
        $region62: #{tpu_custom_call.1} parent=59 // pred_check_branch
          %519 = sbr.rel (%p517) target = $region64
        $region63: #{tpu_custom_call.1} parent=59 // pred_region
          %s520 = sand.u32 %s152, 1
          %s521 = scalar_lea.sflag [#allocation5], %s520
          %s522 = sand.u32 %s152, 1
          %s523 = scalar_lea.vmem [#allocation10], %s522
          %525 = dma.done %s521, 16
        $region64: #{tpu_custom_call.1} parent=59 // pred_fallthru
          _
        // Predicated region
        $region65: #{tpu_custom_call.1} parent=59 // pred_check
          %p526 = pneg %p195
        $region66: #{tpu_custom_call.1} parent=59 // pred_check_branch
          %528 = sbr.rel (%p526) target = $region68
        $region67: #{tpu_custom_call.1} parent=59 // pred_region
          %s529 = sand.u32 %s180, 1
          %s530 = scalar_lea.sflag [#allocation12], %s529
          %s531 = sand.u32 %s180, 1
          %s532 = scalar_lea.vmem [#allocation11], %s531
          %534 = dma.done %s530, 16
        $region68: #{tpu_custom_call.1} parent=59 // pred_fallthru
          _
      $region60: #{tpu_custom_call.1} parent=5 // pred_fallthru
        _
    $region6: #{tpu_custom_call.1} parent=1 // loop_footer
      %s30 = sadd.s32 1, %s26
    $region7: #{tpu_custom_call.1} parent=1 // loop_footer_branch
      %25 = sbr.rel target = $region3
    $region8: #{tpu_custom_call.1} parent=1 // loop_exit
      _
    %535 = vsyncpa [#allocation4], 1
    %s536 = scalar_lea.sflag [#allocation4], 1
    %537 = vsyncpa %s536, 1
    %538 = vsyncpa [#allocation9], 1
    %s539 = scalar_lea.sflag [#allocation9], 1
    %540 = vsyncpa %s539, 1
    %541 = vsyncpa [#allocation5], 1
    %s542 = scalar_lea.sflag [#allocation5], 1
    %543 = vsyncpa %s542, 1
    %544 = vsyncpa [#allocation12], 1
    %s545 = scalar_lea.sflag [#allocation12], 1
    %546 = vsyncpa %s545, 1
    %547 = vsyncpa [#allocation6], 1
    %s548 = scalar_lea.sflag [#allocation6], 1
    %549 = vsyncpa %s548, 1

</llo_original>
